<compile_context>
chip_gen: v6e
topology: v6e:2x2x1
jax: 0.10.0
libtpu: 0.0.40
codegen_flags: <defaults>
</compile_context>

<pallas_src>
import functools

import jax
import jax.numpy as jnp
import numpy as np
from jax import lax
from jax.experimental import pallas as pl
from jax.experimental.pallas import tpu as pltpu

PADDING_IDX = 0
DROPOUT_P = 0.2
TRAINING = True                 # nn.Module default is train mode -> dropout on
ROWS_PER_STEP = 128             # gathered rows per grid step (multiple of 8)
RESIDENT_TABLE_BYTES = 8 * 1024 * 1024   # fast-path threshold (safe on v7x 64 MiB VMEM)
SKIP_PADDING_DMA = True         # assumes weight[PADDING_IDX] == 0 (nn.Embedding default init)

_DROP_THRESHOLD = int(round(DROPOUT_P * 4294967296.0))   # p * 2^32
_KEEP_SCALE = 1.0 / (1.0 - DROPOUT_P)


def _round_up(x, m):
    return ((x + m - 1) // m) * m


def _apply_dropout(rows_f32, seed_ref, base_u):
    """Counter-based hashed dropout.  Mask depends only on (seed, global idx)."""
    if not (TRAINING and DROPOUT_P > 0.0):
        return rows_f32
    r, e = rows_f32.shape
    # All index math in uint32 (wraps mod 2^32; no signed overflow).
    row_u = lax.broadcasted_iota(jnp.int32, (r, e), 0).astype(jnp.uint32) + base_u
    lane_u = lax.broadcasted_iota(jnp.int32, (r, e), 1).astype(jnp.uint32)
    x = row_u * jnp.uint32(e) + lane_u
    x = x ^ (seed_ref[0].astype(jnp.uint32) * jnp.uint32(0x9E3779B9))
    x = x ^ (x >> 16)
    x = x * jnp.uint32(0x7FEB352D)
    x = x ^ (x >> 15)
    x = x * jnp.uint32(0x846CA68B)
    x = x ^ (x >> 16)
    keep = x >= jnp.uint32(_DROP_THRESHOLD)               # P(keep) = 1 - p
    return jnp.where(keep, rows_f32 * jnp.float32(_KEEP_SCALE), jnp.float32(0.0))


def _resident_kernel(ids_ref, seed_ref, w_ref, out_ref, rows_ref):
    """Fast path: whole (V, E) table resident in VMEM; in-VMEM row gather."""
    r, e = out_ref.shape
    t = pl.program_id(0)
    base = t * r

    def gather(j, carry):
        rows_ref[j] = w_ref[ids_ref[base + j]]
        return carry

    lax.fori_loop(0, r, gather, 0)

    base_u = t.astype(jnp.uint32) * jnp.uint32(r)
    rows = rows_ref[...].astype(jnp.float32)
    out_ref[...] = _apply_dropout(rows, seed_ref, base_u).astype(out_ref.dtype)


def _hbm_gather_kernel(ids_ref, seed_ref, w_hbm_ref, out_ref, rows_ref, sem):
    """HBM path: batched manual row DMAs into one contiguous (R, E) scratch."""
    r, e = out_ref.shape
    t = pl.program_id(0)
    base = t * r

    def row_copy(j, idx):
        return pltpu.make_async_copy(
            w_hbm_ref.at[pl.ds(idx, 1), :],      # (1, E) row in HBM
            rows_ref.at[pl.ds(j, 1), :],         # (1, E) row in VMEM scratch
            sem)

    def start(j, carry):
        idx = ids_ref[base + j]
        if SKIP_PADDING_DMA:
            @pl.when(idx != PADDING_IDX)
            def _():
                row_copy(j, idx).start()

            @pl.when(idx == PADDING_IDX)
            def _():
                rows_ref[j] = jnp.zeros((e,), rows_ref.dtype)
        else:
            row_copy(j, idx).start()
        return carry

    # Issue all row DMAs first (many copies in flight), then wait for them all.
    lax.fori_loop(0, r, start, 0)

    def wait(j, carry):
        idx = ids_ref[base + j]
        if SKIP_PADDING_DMA:
            @pl.when(idx != PADDING_IDX)
            def _():
                row_copy(j, idx).wait()
        else:
            row_copy(j, idx).wait()
        return carry

    lax.fori_loop(0, r, wait, 0)

    base_u = t.astype(jnp.uint32) * jnp.uint32(r)
    rows = rows_ref[...].astype(jnp.float32)
    out_ref[...] = _apply_dropout(rows, seed_ref, base_u).astype(out_ref.dtype)


def embedding_forward(inputs, weight, seed, *, rows_per_step=ROWS_PER_STEP,
                      force_hbm_gather=False, out_dtype=jnp.float32):
    """inputs: (B, S) int ids; weight: (V, E); seed: (1,) int32.

    Returns (emb: (B, S, E) with dropout, lengths: (B,) int32, masks: (B, S)
    bool).  Fully jittable (no host sync).  out_dtype can be bf16 to halve
    HBM writeback traffic if downstream layers accept it.
    """
    b, s = inputs.shape
    v, e = weight.shape
    n_tok = b * s
    r = min(_round_up(rows_per_step, 8), _round_up(n_tok, 8))
    n_pad = _round_up(n_tok, r)

    ids = inputs.reshape(n_tok).astype(jnp.int32)
    # Clamp so a bad id can never trigger an out-of-bounds HBM DMA.
    ids = jnp.clip(ids, 0, v - 1)
    ids = jnp.pad(ids, (0, n_pad - n_tok), constant_values=PADDING_IDX)

    table_bytes = v * e * weight.dtype.itemsize
    resident = (not force_hbm_gather) and table_bytes <= RESIDENT_TABLE_BYTES

    grid = (n_pad // r,)
    out_specs = pl.BlockSpec((r, e), lambda t, ids_ref, seed_ref: (t, 0))

    if resident:
        kernel = _resident_kernel
        in_specs = [pl.BlockSpec((v, e), lambda t, ids_ref, seed_ref: (0, 0))]
        scratch = [pltpu.VMEM((r, e), weight.dtype)]
        vmem_needed = 2 * table_bytes + 6 * r * e * 4 + (1 << 20)
    else:
        kernel = _hbm_gather_kernel
        in_specs = [pl.BlockSpec(memory_space=pl.ANY)]   # weight stays in HBM
        scratch = [pltpu.VMEM((r, e), weight.dtype), pltpu.SemaphoreType.DMA(())]
        vmem_needed = 8 * r * e * 4 + (1 << 20)

    vmem_limit = int(min(32 * 1024 * 1024, max(4 * 1024 * 1024, vmem_needed)))

    emb_flat = pl.pallas_call(
        kernel,
        out_shape=jax.ShapeDtypeStruct((n_pad, e), out_dtype),
        grid_spec=pltpu.PrefetchScalarGridSpec(
            num_scalar_prefetch=2,            # (ids, seed) land in SMEM
            grid=grid,
            in_specs=in_specs,
            out_specs=out_specs,
            scratch_shapes=scratch,
        ),
        compiler_params=pltpu.CompilerParams(
            dimension_semantics=("parallel",),   # token tiles shard across TCs (v7x)
            vmem_limit_bytes=vmem_limit,
        ),
    )(ids, seed, weight)

    emb = emb_flat[:n_tok].reshape(b, s, e)

    # masks / lengths: trivially cheap on the int ids -> plain XLA, not kernel.
    masks = inputs != PADDING_IDX
    lengths = jnp.sum(masks, axis=-1).astype(jnp.int32)
    return emb, lengths, masks


if __name__ == "__main__":
    key = jax.random.PRNGKey(0)
    k_w, k_idx = jax.random.split(key)

    B, S = 2, 8
    V, E = 32, 128      # E multiple of 128 -> lane-dense unmasked output stores

    # Deterministic table; nn.Embedding (default init) zeroes the padding row.
    weight = jax.random.normal(k_w, (V, E), dtype=jnp.float32)
    weight = weight.at[PADDING_IDX].set(0.0)

    # Token ids with trailing padding (id == padding_idx == 0).
    inputs = jax.random.randint(k_idx, (B, S), 1, V, dtype=jnp.int32)
    inputs = inputs.at[0, 6:].set(PADDING_IDX)   # row 0: length 6
    inputs = inputs.at[1, 5:].set(PADDING_IDX)   # row 1: length 5

    seed = jnp.array([1234], dtype=jnp.int32)

    # Exercise both paths: resident-table fast path (auto, 16 KiB table) and
    # the manual-DMA HBM gather path (forced).
    fwd_fast = jax.jit(embedding_forward)
    fwd_hbm = jax.jit(functools.partial(embedding_forward, force_hbm_gather=True))

    emb_fast, lengths, masks = fwd_fast(inputs, weight, seed)
    jax.block_until_ready((emb_fast, lengths, masks))
    emb_hbm, _, _ = fwd_hbm(inputs, weight, seed)
    jax.block_until_ready(emb_hbm)

    # ---- correctness checks ------------------------------------------------
    emb_np = np.asarray(emb_fast)
    hbm_np = np.asarray(emb_hbm)
    # Both gather paths use the same tiling-invariant dropout mask -> identical.
    np.testing.assert_allclose(emb_np, hbm_np, rtol=1e-6, atol=1e-6)

    ref_np = np.asarray(weight)[np.asarray(inputs)]          # plain gather
    scale = 1.0 / (1.0 - DROPOUT_P)
    ok = np.isclose(emb_np, 0.0, atol=1e-6) | np.isclose(
        emb_np, scale * ref_np, rtol=1e-5, atol=1e-6)
    assert ok.all(), "embedding + dropout values mismatch"

    nonpad = np.asarray(masks)[..., None] & (np.abs(ref_np) > 1e-6)
    keep_rate = float((np.abs(emb_np) > 1e-6)[nonpad].mean())
    assert 0.5 < keep_rate < 0.95, f"implausible dropout keep rate {keep_rate}"

    assert np.array_equal(np.asarray(lengths), np.array([6, 5], dtype=np.int32))
    assert np.array_equal(np.asarray(masks), np.asarray(inputs) != PADDING_IDX)

    # PyTorch semantics: truncate to lengths.max().  Data-dependent shape ->
    # applied outside the jitted hot path (single host read).
    max_len = int(jnp.max(lengths))
    emb_out = emb_fast[:, :max_len]
    masks_out = masks[:, :max_len]
    assert emb_out.shape == (B, max_len, E)
    assert masks_out.shape == (B, max_len)
    assert lengths.shape == (B,)

    print("KERNEL_OK")
</pallas_src>

<mosaic_0001>
module attributes {stable_mosaic.version = 11 : i64} {
  func.func @_resident_kernel(%arg0: i32, %arg1: memref<16xi32, #tpu.memory_space<smem>>, %arg2: memref<1xi32, #tpu.memory_space<smem>>, %arg3: memref<32x128xf32, #tpu.memory_space<vmem>>, %arg4: memref<16x128xf32, #tpu.memory_space<vmem>>, %arg5: memref<16x128xf32, #tpu.memory_space<vmem>>) attributes {dimension_semantics = [#tpu.dimension_semantics<parallel>], iteration_bounds = array<i64: 1>, scalar_prefetch = 2 : i64, scratch_operands = 1 : i64, tpu.core_type = #tpu.core_type<tc>, window_params = [{pipeline_mode = #tpu.pipeline_mode<synchronous>, transform_indices = @transform_0, window_bounds = array<i64: 32, 128>}, {transform_indices = @transform_1, window_bounds = array<i64: 16, 128>}]} {
    %c16_i32 = arith.constant 16 : i32
    %0 = arith.muli %arg0, %c16_i32 : i32
    %c0_i32 = arith.constant 0 : i32
    %c16_i32_0 = arith.constant 16 : i32
    %1 = arith.addi %c0_i32, %c16_i32_0 : i32
    %c1_i32 = arith.constant 1 : i32
    scf.for %arg6 = %c0_i32 to %1 step %c1_i32  : i32 {
      %35 = arith.addi %0, %arg6 : i32
      %36 = arith.index_cast %35 : i32 to index
      %37 = memref.load %arg1[%36] : memref<16xi32, #tpu.memory_space<smem>>
      %38 = arith.index_cast %37 : i32 to index
      %c0_10 = arith.constant 0 : index
      %39 = vector.load %arg3[%38, %c0_10] : memref<32x128xf32, #tpu.memory_space<vmem>>, vector<1x128xf32>
      %40 = vector.shape_cast %39 : vector<1x128xf32> to vector<128xf32>
      %41 = arith.index_cast %arg6 : i32 to index
      %c0_11 = arith.constant 0 : index
      %42 = vector.load %arg5[%41, %c0_11] : memref<16x128xf32, #tpu.memory_space<vmem>>, vector<1x128xf32>
      %43 = vector.shape_cast %42 : vector<1x128xf32> to vector<128xf32>
      %44 = vector.shape_cast %40 : vector<128xf32> to vector<1x128xf32>
      tpu.vector_store %arg5[%41, %c0_11], %44 {strides = array<i32>} : memref<16x128xf32, #tpu.memory_space<vmem>>, vector<1x128xf32>,
    }
    %c16_i32_1 = arith.constant 16 : i32
    %c16_i32_2 = arith.constant 16 : i32
    %2 = arith.muli %arg0, %c16_i32_2 : i32
    %c0 = arith.constant 0 : index
    %c0_3 = arith.constant 0 : index
    %3 = vector.load %arg5[%c0, %c0_3] : memref<16x128xf32, #tpu.memory_space<vmem>>, vector<16x128xf32>
    %4 = tpu.iota {dimensions = array<i32: 0>} : vector<16x128xi32>
    %5 = vector.broadcast %2 : i32 to vector<16x128xi32>
    %6 = arith.addi %4, %5 : vector<16x128xi32>
    %7 = tpu.iota {dimensions = array<i32: 1>} : vector<16x128xi32>
    %c128_i32 = arith.constant 128 : i32
    %8 = vector.broadcast %c128_i32 : i32 to vector<16x128xi32>
    %9 = arith.muli %6, %8 : vector<16x128xi32>
    %10 = arith.addi %9, %7 : vector<16x128xi32>
    %c0_4 = arith.constant 0 : index
    %11 = memref.load %arg2[%c0_4] : memref<1xi32, #tpu.memory_space<smem>>
    %c-1640531527_i32 = arith.constant -1640531527 : i32
    %12 = arith.muli %11, %c-1640531527_i32 : i32
    %13 = vector.broadcast %12 : i32 to vector<16x128xi32>
    %14 = arith.xori %10, %13 : vector<16x128xi32>
    %c16_i32_5 = arith.constant 16 : i32
    %15 = vector.broadcast %c16_i32_5 : i32 to vector<16x128xi32>
    %16 = arith.shrui %14, %15 : vector<16x128xi32>
    %17 = arith.xori %14, %16 : vector<16x128xi32>
    %c2146121005_i32 = arith.constant 2146121005 : i32
    %18 = vector.broadcast %c2146121005_i32 : i32 to vector<16x128xi32>
    %19 = arith.muli %17, %18 : vector<16x128xi32>
    %c15_i32 = arith.constant 15 : i32
    %20 = vector.broadcast %c15_i32 : i32 to vector<16x128xi32>
    %21 = arith.shrui %19, %20 : vector<16x128xi32>
    %22 = arith.xori %19, %21 : vector<16x128xi32>
    %c-2073254261_i32 = arith.constant -2073254261 : i32
    %23 = vector.broadcast %c-2073254261_i32 : i32 to vector<16x128xi32>
    %24 = arith.muli %22, %23 : vector<16x128xi32>
    %c16_i32_6 = arith.constant 16 : i32
    %25 = vector.broadcast %c16_i32_6 : i32 to vector<16x128xi32>
    %26 = arith.shrui %24, %25 : vector<16x128xi32>
    %27 = arith.xori %24, %26 : vector<16x128xi32>
    %c858993459_i32 = arith.constant 858993459 : i32
    %28 = vector.broadcast %c858993459_i32 : i32 to vector<16x128xi32>
    %29 = arith.cmpi uge, %27, %28 : vector<16x128xi32>
    %cst = arith.constant 1.250000e+00 : f32
    %30 = vector.broadcast %cst : f32 to vector<16x128xf32>
    %31 = arith.mulf %3, %30 : vector<16x128xf32>
    %cst_7 = arith.constant 0.000000e+00 : f32
    %32 = vector.broadcast %cst_7 : f32 to vector<16x128xf32>
    %33 = arith.select %29, %31, %32 : vector<16x128xi1>, vector<16x128xf32>
    %c0_8 = arith.constant 0 : index
    %c0_9 = arith.constant 0 : index
    %34 = vector.load %arg4[%c0_8, %c0_9] : memref<16x128xf32, #tpu.memory_space<vmem>>, vector<16x128xf32>
    tpu.vector_store %arg4[%c0_8, %c0_9], %33 {strides = array<i32>} : memref<16x128xf32, #tpu.memory_space<vmem>>, vector<16x128xf32>,
    return
  }
  func.func @transform_0(%arg0: i32, %arg1: memref<16xi32, #tpu.memory_space<smem>>, %arg2: memref<1xi32, #tpu.memory_space<smem>>) -> (i32, i32) {
    %c0_i32 = arith.constant 0 : i32
    %c0_i32_0 = arith.constant 0 : i32
    %c0_i32_1 = arith.constant 0 : i32
    return %c0_i32, %c0_i32_0 : i32, i32
  }
  func.func @transform_1(%arg0: i32, %arg1: memref<16xi32, #tpu.memory_space<smem>>, %arg2: memref<1xi32, #tpu.memory_space<smem>>) -> (i32, i32) {
    %c0_i32 = arith.constant 0 : i32
    %c0_i32_0 = arith.constant 0 : i32
    return %arg0, %c0_i32 : i32, i32
  }
}

</mosaic_0001>

<llo_original>
// kernel: embedding_forward.1
$region0: #{embedding_forward.1}
  #allocation0 [shape = 'u32[]', space=smem, size = 0x4, offset = 0x4, fixed_abs, tag = 'smem constant byte address 0x4 - core index']
  #allocation1 [shape = 'u32[144,128]{1,0:T(1,128)}', space=vmem, size = 0x12000, scoped, tag = 'internal scratch']
  #allocation2 [shape = 'f32[16,128]{1,0:T(8,128)}', space=vmem, size = 0x2000, scoped, tag = 'scratch operand']
  #allocation3 [shape = 's32[1]{0}', space=sflag, size = 0x4, scoped, tag = 'scoped memory for embedding_forward.1']
  #allocation4 [shape = 'u8[512]{0}', space=smem, size = 0x200, scoped, tag = 'prefetched SMEM operand 0']
  #allocation5 [shape = 's32[1]{0:T(128)S(6)}', space=smem, size = 0x200, scoped, tag = 'prefetched SMEM operand 1']
  %s0 = inlined_call_operand.vmem [shape: s32[16], index: 0, kind: input, shape index: {}]
  %s1 = inlined_call_operand.<no memory space> [shape: s32[1], index: 1, kind: input, shape index: {}]
  %s2 = inlined_call_operand.hbm [shape: f32[32,128], index: 2, kind: input, shape index: {}]
  %s3 = inlined_call_operand.hbm [shape: f32[16,128], index: 3, kind: output, shape index: {}]
  %s4 = sld [smem:[#allocation0]]
  $region25: #{embedding_forward.1} parent=0
    _
  %s6 = ssub.s32 1, %s4
  %s7 = scalar_select 0, %s6, %s4
  %s8 = sshll.u32 %s0, 4
  %s9 = int_to_ptr.vmem [resolvable:$true] %s8
  %11 = dma.vmem_to_smem %s9, 16, [#allocation4], [#allocation3]
  %12 = sst [smem:[#allocation5]] %s1
  %13 = dma.done [#allocation3], 16
  %14 = sfence
  $region1: #{embedding_forward.1} parent=0
    #allocation6 [shape = 'u8[16384]{0}', space=vmem, size = 0x4000, scoped, tag = 'input window, operand 2, single buffered']
    #allocation7 [shape = 's32[1]{0}', space=sflag, size = 0x4, scoped, tag = 'scoped memory for embedding_forward.1']
    #allocation8 [shape = 's32[1]{0}', space=sflag, size = 0x4, scoped, tag = 'scoped memory for embedding_forward.1']
    #allocation9 [shape = 'u8[8192]{0}', space=vmem, size = 0x2000, scoped, tag = 'output window, operand 0, single buffered']
    %15 = vsyncpa [#allocation7], 0
    %16 = vsyncpa [#allocation8], 0
    // Predicated region
    $region2: #{embedding_forward.1} parent=1 // pred_check
      _
    $region3: #{embedding_forward.1} parent=1 // pred_check_branch
      %18 = sbr.rel (0) target = $region5
    $region4: #{embedding_forward.1} parent=1 // pred_region
      %s20 = ssub.s32 512, 512
      %21 = vsyncadd [#allocation7], %s20
      %s22 = sshll.u32 [#allocation6], 4
      %s23 = int_to_ptr.vmem [resolvable:$true] %s22
      %28 = dma.hbm_to_vmem [thread:$0]  %s2, 512, %s23, [#allocation7], 128, 128, 8
    $region5: #{embedding_forward.1} parent=1 // pred_fallthru
      _
    // Predicated region
    $region6: #{embedding_forward.1} parent=1 // pred_check
      _
    $region7: #{embedding_forward.1} parent=1 // pred_check_branch
      %30 = sbr.rel (0) target = $region9
    $region8: #{embedding_forward.1} parent=1 // pred_region
      %31 = dma.done [#allocation7], 512
    $region9: #{embedding_forward.1} parent=1 // pred_fallthru
      _
    %s32 = smul.u32 0, 16
    loop: start=0, step=1, limit=16
    $region10: #{embedding_forward.1} parent=1 // loop_pre_header
      _
    $region11: #{embedding_forward.1} parent=1 // loop_header
      %s34 = sphi 0, %s38
      %p35 = scmp.ge.s32.totalorder %s34, 16
    $region12: #{embedding_forward.1} parent=1 // loop_header_branch
      %37 = sbr.rel (%p35) target = $region16
    $region13: #{embedding_forward.1} parent=1 // loop_body
      %s39 = sadd.s32 %s32, %s34
      %s40 = sld [smem:[#allocation4 + %s39]]
      %s41 = scalar_lea.vmem [#allocation6], %s40
      %v42 = vld [vmem:[%s41] sm:$0x1]
      %s43 = scalar_lea.vmem [#allocation2], %s34
      %44 = vst [vmem:[%s43] sm:$0x1] %v42
    $region14: #{embedding_forward.1} parent=1 // loop_footer
      %s38 = sadd.s32 1, %s34
    $region15: #{embedding_forward.1} parent=1 // loop_footer_branch
      %33 = sbr.rel target = $region11
    $region16: #{embedding_forward.1} parent=1 // loop_exit
      _
    %v45 = vld [vmem:[#allocation2] sm:$0xff]
    %v46 = vld [vmem:[#allocation2 + $0x8] sm:$0xff]
    %v47 = vlaneseq
    %v48 = vshrl.u32 %v47, 7
    %v49 = vadd.s32 %v48, 8
    %v50 = vstv %s32
    %v51 = vadd.s32 %v48, %v50
    %v52 = vadd.s32 %v49, %v50
    %v53 = vlaneseq
    %v54 = vand.u32 %v53, 127
    %v55 = vmul.u32 %v51, 128
    %v56 = vmul.u32 %v52, 128
    %v57 = vadd.s32 %v55, %v54
    %v58 = vadd.s32 %v56, %v54
    %s59 = sld [smem:[#allocation5]]
    %s60 = smul.u32 %s59, 2654435769
    %v61 = vstv %s60
    %v62 = vxor.u32 %v57, %v61
    %v63 = vxor.u32 %v58, %v61
    %v64 = vshrl.u32 %v62, 16
    %v65 = vshrl.u32 %v63, 16
    %v66 = vxor.u32 %v62, %v64
    %v67 = vxor.u32 %v63, %v65
    %v68 = vmul.u32 %v66, 2146121005
    %v69 = vmul.u32 %v67, 2146121005
    %v70 = vshrl.u32 %v68, 15
    %v71 = vshrl.u32 %v69, 15
    %v72 = vxor.u32 %v68, %v70
    %v73 = vxor.u32 %v69, %v71
    %v74 = vmul.u32 %v72, 2221713035
    %v75 = vmul.u32 %v73, 2221713035
    %v76 = vshrl.u32 %v74, 16
    %v77 = vshrl.u32 %v75, 16
    %v78 = vxor.u32 %v74, %v76
    %v79 = vxor.u32 %v75, %v77
    %vm80 = vcmp.ge.u32.totalorder %v78, 858993459
    %vm81 = vcmp.ge.u32.totalorder %v79, 858993459
    %v82 = vmul.f32 %v45, 1.25
    %v83 = vmul.f32 %v46, 1.25
    %v84 = vsel %vm80, %v82, 0.0
    %v85 = vsel %vm81, %v83, 0.0
    %86 = vst [vmem:[#allocation9] sm:$0xff] %v84
    %87 = vst [vmem:[#allocation9 + $0x8] sm:$0xff] %v85
    // Predicated region
    $region17: #{embedding_forward.1} parent=1 // pred_check
      _
    $region18: #{embedding_forward.1} parent=1 // pred_check_branch
      %89 = sbr.rel (0) target = $region20
    $region19: #{embedding_forward.1} parent=1 // pred_region
      %s91 = ssub.s32 256, 256
      %92 = vsyncadd [#allocation8], %s91
      %s93 = sshll.u32 [#allocation9], 4
      %s94 = int_to_ptr.vmem [resolvable:$true] %s93
      %99 = dma.vmem_to_hbm [thread:$0]  %s94, 256, %s3, [#allocation8], 128, 128, 8
    $region20: #{embedding_forward.1} parent=1 // pred_fallthru
      _
    // Predicated region
    $region21: #{embedding_forward.1} parent=1 // pred_check
      _
    $region22: #{embedding_forward.1} parent=1 // pred_check_branch
      %101 = sbr.rel (0) target = $region24
    $region23: #{embedding_forward.1} parent=1 // pred_region
      %102 = dma.done [#allocation8], 256
    $region24: #{embedding_forward.1} parent=1 // pred_fallthru
      _
    %103 = vsyncpa [#allocation7], 1
    %104 = vsyncpa [#allocation8], 1

</llo_original>
